<compile_context>
chip_gen: v5e
topology: v5e:2x2
jax: 0.10.0
libtpu: 0.0.40
codegen_flags: <defaults>
</compile_context>

<pallas_src>
import jax
import jax.numpy as jnp
from jax.experimental import pallas as pl
from jax.experimental.pallas import tpu as pltpu

LANE = 128


def _gcn_kernel(adj_ref, x_ref, w_ref, b_ref, o_ref):
    # adj_ref : (N, N)        x_ref : (B, N, F)
    # w_ref   : (F, Kp)       b_ref : (1, Kp)      o_ref : (B, N, Kp)
    adj = adj_ref[...]                       # (N, N)
    w = w_ref[...]                           # (F, Kp)
    b = b_ref[...]                           # (1, Kp), broadcasts over rows
    B = x_ref.shape[0]
    for bi in range(B):                      # tiny static unroll (B=2)
        # Feature transform first (K < F): (N, F) @ (F, Kp) -> (N, Kp)
        xw = jnp.dot(x_ref[bi], w, preferred_element_type=jnp.float32)
        # Graph propagation: (N, N) @ (N, Kp) -> (N, Kp)
        y = jnp.dot(adj, xw, preferred_element_type=jnp.float32)
        # Bias + ReLU, lane-dense store.
        o_ref[bi] = jnp.maximum(y + b, 0.0).astype(o_ref.dtype)


def gcn_layer(x, adj, weight, bias):
    """x: (B, N, F), adj: (N, N), weight: (F, K), bias: (K,) -> (B, N, K)."""
    B, N, F = x.shape
    K = weight.shape[1]

    # Pad the filter (output) dim up to a full 128-lane multiple so in-kernel
    # stores are unmasked / lane-dense; the padded columns are exactly zero
    # (zero weight, zero bias, ReLU(0) = 0) and are sliced off afterwards.
    Kp = max(LANE, -(-K // LANE) * LANE)
    w_pad = jnp.zeros((F, Kp), dtype=x.dtype).at[:, :K].set(weight)
    b_pad = jnp.zeros((1, Kp), dtype=x.dtype).at[:, :K].set(bias)

    vmem = pl.BlockSpec(memory_space=pltpu.MemorySpace.VMEM)
    out_pad = pl.pallas_call(
        _gcn_kernel,
        out_shape=jax.ShapeDtypeStruct((B, N, Kp), x.dtype),
        in_specs=[vmem, vmem, vmem, vmem],   # adj, x, W, bias fully VMEM-resident
        out_specs=vmem,
    )(adj, x, w_pad, b_pad)

    return out_pad[:, :, :K]


def gcn_layer_ref(x, adj, weight, bias):
    """Plain-JAX reference matching the PyTorch forward (adj @ x, then Linear)."""
    h = jnp.einsum("nm,bmf->bnf", adj, x)
    return jax.nn.relu(jnp.einsum("bnf,fk->bnk", h, weight) + bias)


if __name__ == "__main__":
    # Small shapes consistent with the module: batch=2, N=16 nodes,
    # num_of_features (T*D) = 32, num_of_filter = 8.
    B, N, F, K = 2, 16, 32, 8

    key = jax.random.PRNGKey(0)
    k_x, k_adj, k_w, k_b = jax.random.split(key, 4)

    x = jax.random.normal(k_x, (B, N, F), dtype=jnp.float32)
    adj = jax.random.uniform(k_adj, (N, N), dtype=jnp.float32)

    # Deterministic Linear(F -> K) params (PyTorch-style uniform init bound),
    # stored pre-transposed as (in_features, out_features).
    bound = 1.0 / (F ** 0.5)
    weight = jax.random.uniform(k_w, (F, K), minval=-bound, maxval=bound,
                                dtype=jnp.float32)
    bias = jax.random.uniform(k_b, (K,), minval=-bound, maxval=bound,
                              dtype=jnp.float32)

    out = gcn_layer(x, adj, weight, bias)
    out = jax.block_until_ready(out)

    ref = gcn_layer_ref(x, adj, weight, bias)
    assert out.shape == (B, N, K)
    # Matmul reorder (adj @ (x @ W)) is exactly associative in real arithmetic;
    # allow small f32 rounding differences vs. the reference order.
    assert jnp.allclose(out, ref, atol=1e-4, rtol=1e-5)

    print("KERNEL_OK")
</pallas_src>

<mosaic_0001>
module attributes {stable_mosaic.version = 11 : i64} {
  func.func @_gcn_kernel(%arg0: memref<16x16xf32, #tpu.memory_space<vmem>>, %arg1: memref<2x16x32xf32, #tpu.memory_space<vmem>>, %arg2: memref<32x128xf32, #tpu.memory_space<vmem>>, %arg3: memref<1x128xf32, #tpu.memory_space<vmem>>, %arg4: memref<2x16x128xf32, #tpu.memory_space<vmem>>) attributes {dimension_semantics = [], scalar_prefetch = 0 : i64, scratch_operands = 0 : i64, tpu.core_type = #tpu.core_type<tc>} {
    %c0 = arith.constant 0 : index
    %c0_0 = arith.constant 0 : index
    %0 = vector.load %arg0[%c0, %c0_0] : memref<16x16xf32, #tpu.memory_space<vmem>>, vector<16x16xf32>
    %c0_1 = arith.constant 0 : index
    %c0_2 = arith.constant 0 : index
    %1 = vector.load %arg2[%c0_1, %c0_2] : memref<32x128xf32, #tpu.memory_space<vmem>>, vector<32x128xf32>
    %c0_3 = arith.constant 0 : index
    %c0_4 = arith.constant 0 : index
    %2 = vector.load %arg3[%c0_3, %c0_4] : memref<1x128xf32, #tpu.memory_space<vmem>>, vector<1x128xf32>
    %c0_5 = arith.constant 0 : index
    %c0_6 = arith.constant 0 : index
    %c0_7 = arith.constant 0 : index
    %3 = vector.load %arg1[%c0_5, %c0_6, %c0_7] : memref<2x16x32xf32, #tpu.memory_space<vmem>>, vector<1x16x32xf32>
    %4 = vector.shape_cast %3 : vector<1x16x32xf32> to vector<16x32xf32>
    %cst = arith.constant dense<0.000000e+00> : vector<16x128xf32>
    %5 = tpu.matmul %4, %1, %cst {dimension_numbers = #tpu.dot_dimension_numbers<[1], [0], [0], [1], [0, 0, 1, 1], [], []>} : vector<16x32xf32>, vector<32x128xf32>, vector<16x128xf32> -> vector<16x128xf32>
    %cst_8 = arith.constant dense<0.000000e+00> : vector<16x128xf32>
    %6 = tpu.matmul %0, %5, %cst_8 {dimension_numbers = #tpu.dot_dimension_numbers<[1], [0], [0], [1], [0, 0, 1, 1], [], []>} : vector<16x16xf32>, vector<16x128xf32>, vector<16x128xf32> -> vector<16x128xf32>
    %7 = vector.broadcast %2 : vector<1x128xf32> to vector<16x128xf32>
    %8 = arith.addf %6, %7 : vector<16x128xf32>
    %cst_9 = arith.constant 0.000000e+00 : f32
    %9 = vector.broadcast %cst_9 : f32 to vector<16x128xf32>
    %10 = arith.maximumf %8, %9 : vector<16x128xf32>
    %c0_10 = arith.constant 0 : index
    %c0_11 = arith.constant 0 : index
    %c0_12 = arith.constant 0 : index
    %11 = vector.load %arg4[%c0_10, %c0_11, %c0_12] : memref<2x16x128xf32, #tpu.memory_space<vmem>>, vector<1x16x128xf32>
    %12 = vector.shape_cast %11 : vector<1x16x128xf32> to vector<16x128xf32>
    %13 = vector.shape_cast %10 : vector<16x128xf32> to vector<1x16x128xf32>
    tpu.vector_store %arg4[%c0_10, %c0_11, %c0_12], %13 {strides = array<i32>} : memref<2x16x128xf32, #tpu.memory_space<vmem>>, vector<1x16x128xf32>,
    %c1 = arith.constant 1 : index
    %c0_13 = arith.constant 0 : index
    %c0_14 = arith.constant 0 : index
    %14 = vector.load %arg1[%c1, %c0_13, %c0_14] : memref<2x16x32xf32, #tpu.memory_space<vmem>>, vector<1x16x32xf32>
    %15 = vector.shape_cast %14 : vector<1x16x32xf32> to vector<16x32xf32>
    %cst_15 = arith.constant dense<0.000000e+00> : vector<16x128xf32>
    %16 = tpu.matmul %15, %1, %cst_15 {dimension_numbers = #tpu.dot_dimension_numbers<[1], [0], [0], [1], [0, 0, 1, 1], [], []>} : vector<16x32xf32>, vector<32x128xf32>, vector<16x128xf32> -> vector<16x128xf32>
    %cst_16 = arith.constant dense<0.000000e+00> : vector<16x128xf32>
    %17 = tpu.matmul %0, %16, %cst_16 {dimension_numbers = #tpu.dot_dimension_numbers<[1], [0], [0], [1], [0, 0, 1, 1], [], []>} : vector<16x16xf32>, vector<16x128xf32>, vector<16x128xf32> -> vector<16x128xf32>
    %18 = vector.broadcast %2 : vector<1x128xf32> to vector<16x128xf32>
    %19 = arith.addf %17, %18 : vector<16x128xf32>
    %cst_17 = arith.constant 0.000000e+00 : f32
    %20 = vector.broadcast %cst_17 : f32 to vector<16x128xf32>
    %21 = arith.maximumf %19, %20 : vector<16x128xf32>
    %c1_18 = arith.constant 1 : index
    %c0_19 = arith.constant 0 : index
    %c0_20 = arith.constant 0 : index
    %22 = vector.load %arg4[%c1_18, %c0_19, %c0_20] : memref<2x16x128xf32, #tpu.memory_space<vmem>>, vector<1x16x128xf32>
    %23 = vector.shape_cast %22 : vector<1x16x128xf32> to vector<16x128xf32>
    %24 = vector.shape_cast %21 : vector<16x128xf32> to vector<1x16x128xf32>
    tpu.vector_store %arg4[%c1_18, %c0_19, %c0_20], %24 {strides = array<i32>} : memref<2x16x128xf32, #tpu.memory_space<vmem>>, vector<1x16x128xf32>,
    return
  }
}

</mosaic_0001>

<llo_original>
// kernel: tpu_custom_call.1
$region0: #{tpu_custom_call.1}
  #allocation0 [shape = 'u32[]', space=smem, size = 0x4, offset = 0x4, fixed_abs, tag = 'smem constant byte address 0x4 - core index']
  #allocation1 [shape = 'u32[72,128]{1,0:T(1,128)}', space=vmem, size = 0x9000, scoped, tag = 'internal scratch']
  %s0 = inlined_call_operand.hbm [shape: f32[16,16], index: 0, kind: input, shape index: {}]
  %s1 = inlined_call_operand.hbm [shape: f32[2,16,32], index: 1, kind: input, shape index: {}]
  %s2 = inlined_call_operand.hbm [shape: f32[32,128], index: 2, kind: input, shape index: {}]
  %s3 = inlined_call_operand.vmem [shape: f32[1,128], index: 3, kind: input, shape index: {}]
  %s4 = inlined_call_operand.hbm [shape: f32[2,16,128], index: 4, kind: output, shape index: {}]
  %s5 = sld [smem:[#allocation0]]
  $region38: #{tpu_custom_call.1} parent=0
    _
  %s7 = ssub.s32 1, %s5
  %s8 = scalar_select 0, %s7, %s5
  $region1: #{tpu_custom_call.1} parent=0
    #allocation2 [shape = 'u8[8192]{0}', space=vmem, size = 0x2000, scoped, tag = 'input window, operand 0, single buffered']
    #allocation3 [shape = 's32[1]{0}', space=sflag, size = 0x4, scoped, tag = 'scoped memory for tpu_custom_call.1']
    #allocation4 [shape = 's32[1]{0}', space=sflag, size = 0x4, scoped, tag = 'scoped memory for tpu_custom_call.1']
    #allocation5 [shape = 'u8[16384]{0}', space=vmem, size = 0x4000, scoped, tag = 'input window, operand 1, single buffered']
    #allocation6 [shape = 's32[1]{0}', space=sflag, size = 0x4, scoped, tag = 'scoped memory for tpu_custom_call.1']
    #allocation7 [shape = 'u8[16384]{0}', space=vmem, size = 0x4000, scoped, tag = 'input window, operand 2, single buffered']
    #allocation8 [shape = 'u8[16384]{0}', space=vmem, size = 0x4000, scoped, tag = 'output window, operand 0, single buffered']
    %9 = vsyncpa [#allocation3], 0
    %10 = vsyncpa [#allocation6], 0
    %11 = vsyncpa [#allocation4], 0
    // Predicated region
    $region2: #{tpu_custom_call.1} parent=1 // pred_check
      _
    $region3: #{tpu_custom_call.1} parent=1 // pred_check_branch
      %13 = sbr.rel (0) target = $region5
    $region4: #{tpu_custom_call.1} parent=1 // pred_region
      %15 = vsyncadd [#allocation3], 0
      %s16 = sshll.u32 %s0, 4
      %s17 = int_to_ptr.hbm [resolvable:$true] %s16
      %s18 = sshll.u32 [#allocation2], 4
      %s19 = int_to_ptr.vmem [resolvable:$true] %s18
      %24 = dma.hbm_to_vmem [thread:$0]  %s17, 256, %s19, [#allocation3], 128, 128, 8
    $region5: #{tpu_custom_call.1} parent=1 // pred_fallthru
      _
    // Predicated region
    $region6: #{tpu_custom_call.1} parent=1 // pred_check
      _
    $region7: #{tpu_custom_call.1} parent=1 // pred_check_branch
      %26 = sbr.rel (0) target = $region9
    $region8: #{tpu_custom_call.1} parent=1 // pred_region
      %28 = vsyncadd [#allocation6], 0
      %s29 = sshll.u32 %s1, 4
      %s30 = int_to_ptr.hbm [resolvable:$true] %s29
      %s31 = sshll.u32 [#allocation5], 4
      %s32 = int_to_ptr.vmem [resolvable:$true] %s31
      %37 = dma.hbm_to_vmem [thread:$0]  %s30, 512, %s32, [#allocation6], 128, 128, 8
    $region9: #{tpu_custom_call.1} parent=1 // pred_fallthru
      _
    // Predicated region
    $region10: #{tpu_custom_call.1} parent=1 // pred_check
      _
    $region11: #{tpu_custom_call.1} parent=1 // pred_check_branch
      %39 = sbr.rel (0) target = $region13
    $region12: #{tpu_custom_call.1} parent=1 // pred_region
      %41 = vsyncadd [#allocation6], 0
      %s42 = sshll.u32 %s2, 4
      %s43 = int_to_ptr.hbm [resolvable:$true] %s42
      %s44 = sshll.u32 [#allocation7], 4
      %s45 = int_to_ptr.vmem [resolvable:$true] %s44
      %50 = dma.hbm_to_vmem [thread:$0]  %s43, 512, %s45, [#allocation6], 128, 128, 8
    $region13: #{tpu_custom_call.1} parent=1 // pred_fallthru
      _
    // Predicated region
    $region14: #{tpu_custom_call.1} parent=1 // pred_check
      _
    $region15: #{tpu_custom_call.1} parent=1 // pred_check_branch
      %52 = sbr.rel (0) target = $region17
    $region16: #{tpu_custom_call.1} parent=1 // pred_region
      _
    $region17: #{tpu_custom_call.1} parent=1 // pred_fallthru
      _
    // Predicated region
    $region18: #{tpu_custom_call.1} parent=1 // pred_check
      _
    $region19: #{tpu_custom_call.1} parent=1 // pred_check_branch
      %54 = sbr.rel (0) target = $region21
    $region20: #{tpu_custom_call.1} parent=1 // pred_region
      %56 = dma.done [#allocation3], 256
    $region21: #{tpu_custom_call.1} parent=1 // pred_fallthru
      _
    // Predicated region
    $region22: #{tpu_custom_call.1} parent=1 // pred_check
      _
    $region23: #{tpu_custom_call.1} parent=1 // pred_check_branch
      %58 = sbr.rel (0) target = $region25
    $region24: #{tpu_custom_call.1} parent=1 // pred_region
      %60 = dma.done [#allocation6], 512
    $region25: #{tpu_custom_call.1} parent=1 // pred_fallthru
      _
    // Predicated region
    $region26: #{tpu_custom_call.1} parent=1 // pred_check
      _
    $region27: #{tpu_custom_call.1} parent=1 // pred_check_branch
      %62 = sbr.rel (0) target = $region29
    $region28: #{tpu_custom_call.1} parent=1 // pred_region
      %64 = dma.done [#allocation6], 512
    $region29: #{tpu_custom_call.1} parent=1 // pred_fallthru
      _
    %v65 = vld [vmem:[#allocation2] sm:$0xff]
    %v66 = vld [vmem:[#allocation2 + $0x8] sm:$0xff]
    %v67 = vld [vmem:[#allocation7] sm:$0xff]
    %v68 = vld [vmem:[#allocation7 + $0x8] sm:$0xff]
    %v69 = vld [vmem:[#allocation7 + $0x10] sm:$0xff]
    %v70 = vld [vmem:[#allocation7 + $0x18] sm:$0xff]
    %v71 = vld [vmem:[%s3] sm:$0x1]
    %v72 = vld [vmem:[#allocation5] sm:$0xff]
    %v73 = vld [vmem:[#allocation5 + $0x8] sm:$0xff]
    %vm74 = vcmask 261120
    %v76 = vsel %vm74, %v72, 0
    %v79 = vsel %vm74, %v73, 0
    %81 = vmatpush.msra.mxu0 0.0
    %82 = vmatpush.msra.mxu0 0.0
    %83 = vmatpush.msra.mxu0 0.0
    %84 = vmatpush.msra.mxu0 0.0
    %85 = vmatpush.msra.mxu0 0.0
    %86 = vmatpush.msra.mxu0 0.0
    %87 = vmatpush.msra.mxu0 0.0
    %88 = vmatpush.msra.mxu0 0.0
    %89 = vmatpush.msra.mxu0 0.0
    %90 = vmatpush.msra.mxu0 0.0
    %91 = vmatpush.msra.mxu0 0.0
    %92 = vmatpush.msra.mxu0 0.0
    %93 = vmatpush.msra.mxu0 %v70
    %94 = vmatpush.msra.mxu0 %v69
    %95 = vmatpush.msra.mxu0 %v68
    %96 = vmatpush.msra.mxu0 %v67
    %97 = vmatmul.f32.gmra.mxu0 %v76
    %v98 = vpop.f32.mrf.mxu0
    %v99 = vadd.f32 0.0, %v98
    %100 = vmatmul.f32.gmra.mxu0 %v79
    %v101 = vpop.f32.mrf.mxu0
    %v102 = vadd.f32 0.0, %v101
    %103 = vdwg.mxu0
    %v105 = vperm.slane %v71, 0
    %vm107 = vcmask 130048
    %v109 = vsel %vm107, %v65, 0
    %v112 = vsel %vm107, %v66, 0
    %114 = vmatpush.msra.mxu0 0.0
    %115 = vmatpush.msra.mxu0 0.0
    %116 = vmatpush.msra.mxu0 0.0
    %117 = vmatpush.msra.mxu0 0.0
    %118 = vmatpush.msra.mxu0 0.0
    %119 = vmatpush.msra.mxu0 0.0
    %120 = vmatpush.msra.mxu0 0.0
    %121 = vmatpush.msra.mxu0 0.0
    %122 = vmatpush.msra.mxu0 0.0
    %123 = vmatpush.msra.mxu0 0.0
    %124 = vmatpush.msra.mxu0 0.0
    %125 = vmatpush.msra.mxu0 0.0
    %126 = vmatpush.msra.mxu0 0.0
    %127 = vmatpush.msra.mxu0 0.0
    %128 = vmatpush.msra.mxu0 %v102
    %129 = vmatpush.msra.mxu0 %v99
    %130 = vmatmul.f32.gmra.mxu0 %v109
    %v131 = vpop.f32.mrf.mxu0
    %v132 = vadd.f32 %v105, %v131
    %133 = vmatmul.f32.gmra.mxu0 %v112
    %v134 = vpop.f32.mrf.mxu0
    %v135 = vadd.f32 %v105, %v134
    %136 = vdwg.mxu0
    %v137 = vmax.f32 %v132, 0.0
    %v138 = vmax.f32 %v135, 0.0
    %139 = vst [vmem:[#allocation8] sm:$0xff] %v137
    %140 = vst [vmem:[#allocation8 + $0x8] sm:$0xff] %v138
    %s141 = scalar_lea.vmem [#allocation5], 16
    %v142 = vld [vmem:[%s141] sm:$0xff]
    %v143 = vld [vmem:[%s141 + $0x8] sm:$0xff]
    %v145 = vsel %vm74, %v142, 0
    %v148 = vsel %vm74, %v143, 0
    %150 = vmatpush.msra.mxu0 0.0
    %151 = vmatpush.msra.mxu0 0.0
    %152 = vmatpush.msra.mxu0 0.0
    %153 = vmatpush.msra.mxu0 0.0
    %154 = vmatpush.msra.mxu0 0.0
    %155 = vmatpush.msra.mxu0 0.0
    %156 = vmatpush.msra.mxu0 0.0
    %157 = vmatpush.msra.mxu0 0.0
    %158 = vmatpush.msra.mxu0 0.0
    %159 = vmatpush.msra.mxu0 0.0
    %160 = vmatpush.msra.mxu0 0.0
    %161 = vmatpush.msra.mxu0 0.0
    %162 = vmatpush.msra.mxu0 %v70
    %163 = vmatpush.msra.mxu0 %v69
    %164 = vmatpush.msra.mxu0 %v68
    %165 = vmatpush.msra.mxu0 %v67
    %166 = vmatmul.f32.gmra.mxu0 %v145
    %v167 = vpop.f32.mrf.mxu0
    %v168 = vadd.f32 0.0, %v167
    %169 = vmatmul.f32.gmra.mxu0 %v148
    %v170 = vpop.f32.mrf.mxu0
    %v171 = vadd.f32 0.0, %v170
    %172 = vdwg.mxu0
    %173 = vmatpush.msra.mxu0 0.0
    %174 = vmatpush.msra.mxu0 0.0
    %175 = vmatpush.msra.mxu0 0.0
    %176 = vmatpush.msra.mxu0 0.0
    %177 = vmatpush.msra.mxu0 0.0
    %178 = vmatpush.msra.mxu0 0.0
    %179 = vmatpush.msra.mxu0 0.0
    %180 = vmatpush.msra.mxu0 0.0
    %181 = vmatpush.msra.mxu0 0.0
    %182 = vmatpush.msra.mxu0 0.0
    %183 = vmatpush.msra.mxu0 0.0
    %184 = vmatpush.msra.mxu0 0.0
    %185 = vmatpush.msra.mxu0 0.0
    %186 = vmatpush.msra.mxu0 0.0
    %187 = vmatpush.msra.mxu0 %v171
    %188 = vmatpush.msra.mxu0 %v168
    %189 = vmatmul.f32.gmra.mxu0 %v109
    %v190 = vpop.f32.mrf.mxu0
    %v191 = vadd.f32 %v105, %v190
    %192 = vmatmul.f32.gmra.mxu0 %v112
    %v193 = vpop.f32.mrf.mxu0
    %v194 = vadd.f32 %v105, %v193
    %195 = vdwg.mxu0
    %v196 = vmax.f32 %v191, 0.0
    %v197 = vmax.f32 %v194, 0.0
    %s198 = scalar_lea.vmem [#allocation8], 16
    %199 = vst [vmem:[%s198] sm:$0xff] %v196
    %200 = vst [vmem:[%s198 + $0x8] sm:$0xff] %v197
    // Predicated region
    $region30: #{tpu_custom_call.1} parent=1 // pred_check
      _
    $region31: #{tpu_custom_call.1} parent=1 // pred_check_branch
      %202 = sbr.rel (0) target = $region33
    $region32: #{tpu_custom_call.1} parent=1 // pred_region
      %204 = vsyncadd [#allocation4], 0
      %s205 = sshll.u32 [#allocation8], 4
      %s206 = int_to_ptr.vmem [resolvable:$true] %s205
      %s207 = sshll.u32 %s4, 4
      %s208 = int_to_ptr.hbm [resolvable:$true] %s207
      %213 = dma.vmem_to_hbm [thread:$0]  %s206, 512, %s208, [#allocation4], 128, 128, 8
    $region33: #{tpu_custom_call.1} parent=1 // pred_fallthru
      _
    // Predicated region
    $region34: #{tpu_custom_call.1} parent=1 // pred_check
      _
    $region35: #{tpu_custom_call.1} parent=1 // pred_check_branch
      %215 = sbr.rel (0) target = $region37
    $region36: #{tpu_custom_call.1} parent=1 // pred_region
      %217 = dma.done [#allocation4], 512
    $region37: #{tpu_custom_call.1} parent=1 // pred_fallthru
      _
    %218 = vsyncpa [#allocation3], 1
    %219 = vsyncpa [#allocation6], 1
    %220 = vsyncpa [#allocation4], 1

</llo_original>
